<compile_context>
chip_gen: v7x
topology: tpu7x:2x2x1
jax: 0.10.0
libtpu: 0.0.40
codegen_flags: <defaults>
</compile_context>

<pallas_src>
from functools import partial

import jax
import jax.numpy as jnp
from jax.experimental import pallas as pl
from jax.experimental.pallas import tpu as pltpu


def plnet_kernel(x_ref, wt_ref, bias_ref, y_ref):
    # x_ref   : (TM, D)  input rows (caller dtype; cast to bf16 for the MXU)
    # wt_ref  : (D, TN)  pre-transposed Linear weight chunk, bf16
    # bias_ref: (1,)     scalar PLNet bias (SMEM)
    # y_ref   : (TM, 1)  f32; VMEM-resident accumulator across the j axis
    j = pl.program_id(1)

    x = x_ref[...].astype(jnp.bfloat16)
    z = jnp.dot(x, wt_ref[...], preferred_element_type=jnp.float32)  # (TM, TN)
    part = 0.5 * jnp.sum(z * z, axis=-1, keepdims=True)              # (TM, 1)

    @pl.when(j == 0)
    def _():
        y_ref[...] = part + bias_ref[0]

    @pl.when(j > 0)
    def _():
        y_ref[...] += part


def _pick_tn(D, cap):
    """Largest output-dim tile that is a multiple of 128, divides D, <= cap."""
    if D <= cap:
        return D
    tn = (cap // 128) * 128
    while tn >= 128:
        if D % tn == 0:
            return tn
        tn -= 128
    # TODO(synk): mask the trailing partial W tile instead of keeping all of D
    # resident when D has no 128-multiple divisor <= cap.
    return D


def _pick_tiles(M, D, x_itemsize):
    """Shrink (TM, TN) until the rough double-buffered VMEM footprint fits."""
    tm_cap, tn_cap = 1024, 2048
    while True:
        tm = M if M < tm_cap else tm_cap
        tn = _pick_tn(D, tn_cap)
        vmem = (2 * tm * D * x_itemsize   # double-buffered x tiles
                + 2 * D * tn * 2          # double-buffered bf16 W tiles
                + tm * tn * 4             # z intermediate
                + 2 * tm * 128 * 4)       # (TM, 1) output block, lane-padded
        if vmem <= 44 * 1024 * 1024:
            return tm, tn
        if tm_cap > 256:
            tm_cap //= 2
        elif tn_cap > 256:
            tn_cap //= 2
        else:
            return tm, tn


@partial(jax.jit, static_argnames=("tm", "tn"))
def plnet_forward(x, W, b, bias, *, tm=None, tn=None):
    """x: [B, N, D]; W: [D, D] (PyTorch Linear layout, out x in);
    b: [D] Linear bias (cancels exactly, kept for interface parity);
    bias: [1] PLNet scalar bias.  Returns y: [B, N] float32."""
    del b  # bln(x) - bln(0*x) == x @ W^T: the Linear bias cancels exactly.
    B, N, D = x.shape
    M = B * N

    xr = x.reshape(M, D)                    # view; no extra HBM pass over x
    wt = W.astype(jnp.bfloat16).T           # one-time (D_in, D_out) bf16 copy
    bias1 = bias.reshape(1).astype(jnp.float32)

    auto_tm, auto_tn = _pick_tiles(M, D, xr.dtype.itemsize)
    tm = auto_tm if tm is None else tm
    tn = auto_tn if tn is None else tn
    assert D % tn == 0, "tn must divide D (garbage W columns would be summed)"
    assert tm == M or tm % 8 == 0, "tm must be a multiple of 8 or equal M"

    g = pl.cdiv(M, tm)                      # partial last row tile is fine:
    nj = D // tn                            # its extra rows are never stored.

    y = pl.pallas_call(
        plnet_kernel,
        out_shape=jax.ShapeDtypeStruct((M, 1), jnp.float32),
        grid=(g, nj),
        in_specs=[
            pl.BlockSpec((tm, D), lambda i, j: (i, 0)),           # x row tile
            pl.BlockSpec((D, tn), lambda i, j: (0, j)),           # W^T col tile
            pl.BlockSpec(memory_space=pltpu.MemorySpace.SMEM),    # scalar bias
        ],
        out_specs=pl.BlockSpec((tm, 1), lambda i, j: (i, 0)),     # accumulator
        compiler_params=pltpu.CompilerParams(
            dimension_semantics=("parallel", "arbitrary"),
            vmem_limit_bytes=64 * 1024 * 1024,
        ),
        cost_estimate=pl.CostEstimate(
            flops=2 * M * D * D,
            bytes_accessed=M * D * xr.dtype.itemsize + D * D * 2 + M * 4,
            transcendentals=0,
        ),
    )(xr, wt, bias1)

    return y.reshape(B, N)


def _reference(x, W, bias):
    """Reference with bf16-rounded operands / f32 accumulation (kernel numerics)."""
    xbf = x.astype(jnp.bfloat16).astype(jnp.float32)
    Wbf = W.astype(jnp.bfloat16).astype(jnp.float32)
    z = xbf @ Wbf.T
    return 0.5 * jnp.sum(z * z, axis=-1) + bias[0]


if __name__ == "__main__":
    key = jax.random.PRNGKey(0)

    # --- Test 1: small shapes (batch=2, seq=8, hidden=32), single-tile path ---
    B, N, D = 2, 8, 32
    kx, kw, kb, kx2, kw2, kb2 = jax.random.split(key, 6)

    x = jax.random.normal(kx, (B, N, D), dtype=jnp.float32)
    W = 0.1 * jax.random.normal(kw, (D, D), dtype=jnp.float32)   # Linear weight (out, in)
    b = 0.1 * jax.random.normal(kb, (D,), dtype=jnp.float32)     # Linear bias
    bias = jnp.zeros((1,), dtype=jnp.float32)                    # PLNet use_bias param

    y = plnet_forward(x, W, b, bias)
    jax.block_until_ready(y)
    assert y.shape == (B, N)

    y_ref = _reference(x, W, bias)
    assert jnp.allclose(y, y_ref, atol=1e-3, rtol=1e-3)

    # Full original-module reference (both bln() calls, f32); loose tolerance
    # covers the documented bf16 MXU-input precision choice.
    h = x @ W.T + b
    h0 = (0.0 * h) @ W.T + b
    y_full = 0.5 * jnp.sum((h - h0) ** 2, axis=-1) + bias[0]
    assert jnp.allclose(y, y_full, atol=5e-2, rtol=5e-2)

    # --- Test 2: exercise the tiled paths (g > 1 with a partial row tile, and
    #     nj > 1 accumulation over W's output dim) with forced small tiles. ---
    B2, N2, D2 = 4, 100, 256                                     # M = 400
    x2 = jax.random.normal(kx2, (B2, N2, D2), dtype=jnp.float32)
    W2 = 0.05 * jax.random.normal(kw2, (D2, D2), dtype=jnp.float32)
    b2 = 0.05 * jax.random.normal(kb2, (D2,), dtype=jnp.float32)
    bias2 = jnp.full((1,), 0.25, dtype=jnp.float32)

    y2 = plnet_forward(x2, W2, b2, bias2, tm=128, tn=128)        # g=4, nj=2
    jax.block_until_ready(y2)
    assert y2.shape == (B2, N2)
    y2_ref = _reference(x2, W2, bias2)
    assert jnp.allclose(y2, y2_ref, atol=1e-2, rtol=1e-3)

    print("KERNEL_OK")
</pallas_src>

<mosaic_0001>
module attributes {stable_mosaic.version = 11 : i64} {
  func.func @plnet_kernel(%arg0: i32, %arg1: i32, %arg2: memref<16x32xf32, #tpu.memory_space<vmem>>, %arg3: memref<32x32xbf16, #tpu.memory_space<vmem>>, %arg4: memref<1xf32, #tpu.memory_space<smem>>, %arg5: memref<16x1xf32, #tpu.memory_space<vmem>>) attributes {dimension_semantics = [#tpu.dimension_semantics<parallel>, #tpu.dimension_semantics<arbitrary>], iteration_bounds = array<i64: 1, 1>, scalar_prefetch = 0 : i64, scratch_operands = 0 : i64, tpu.core_type = #tpu.core_type<tc>, window_params = [{transform_indices = @transform_0, window_bounds = array<i64: 16, 32>}, {transform_indices = @transform_1, window_bounds = array<i64: 32, 32>}, {transform_indices = @transform_2, window_bounds = array<i64: 1>}, {transform_indices = @transform_3, window_bounds = array<i64: 16, 1>}]} {
    %c0 = arith.constant 0 : index
    %c0_0 = arith.constant 0 : index
    %0 = vector.load %arg2[%c0, %c0_0] : memref<16x32xf32, #tpu.memory_space<vmem>>, vector<16x32xf32>
    %1 = arith.truncf %0 : vector<16x32xf32> to vector<16x32xbf16>
    %c0_1 = arith.constant 0 : index
    %c0_2 = arith.constant 0 : index
    %2 = vector.load %arg3[%c0_1, %c0_2] : memref<32x32xbf16, #tpu.memory_space<vmem>>, vector<32x32xbf16>
    %cst = arith.constant dense<0.000000e+00> : vector<16x32xf32>
    %3 = tpu.matmul %1, %2, %cst {dimension_numbers = #tpu.dot_dimension_numbers<[1], [0], [0], [1], [0, 0, 1, 1], [], []>} : vector<16x32xbf16>, vector<32x32xbf16>, vector<16x32xf32> -> vector<16x32xf32>
    %4 = arith.mulf %3, %3 : vector<16x32xf32>
    %cst_3 = arith.constant dense<0.000000e+00> : vector<16xf32>
    %5 = vector.multi_reduction <add>, %4, %cst_3 [1] : vector<16x32xf32> to vector<16xf32>
    %6 = vector.shape_cast %5 : vector<16xf32> to vector<16x1xf32>
    %cst_4 = arith.constant 5.000000e-01 : f32
    %7 = vector.broadcast %cst_4 : f32 to vector<16x1xf32>
    %8 = arith.mulf %7, %6 : vector<16x1xf32>
    %c0_i32 = arith.constant 0 : i32
    %9 = arith.cmpi eq, %arg1, %c0_i32 : i32
    %10 = arith.extui %9 : i1 to i32
    %c0_i32_5 = arith.constant 0 : i32
    %11 = arith.cmpi ne, %10, %c0_i32_5 : i32
    scf.if %11 {
      %c0_8 = arith.constant 0 : index
      %15 = memref.load %arg4[%c0_8] : memref<1xf32, #tpu.memory_space<smem>>
      %16 = vector.broadcast %15 : f32 to vector<16x1xf32>
      %17 = arith.addf %8, %16 : vector<16x1xf32>
      %c0_9 = arith.constant 0 : index
      %c0_10 = arith.constant 0 : index
      %18 = vector.load %arg5[%c0_9, %c0_10] : memref<16x1xf32, #tpu.memory_space<vmem>>, vector<16x1xf32>
      tpu.vector_store %arg5[%c0_9, %c0_10], %17 {strides = array<i32>} : memref<16x1xf32, #tpu.memory_space<vmem>>, vector<16x1xf32>,
    } else {
    }
    %c0_i32_6 = arith.constant 0 : i32
    %12 = arith.cmpi sgt, %arg1, %c0_i32_6 : i32
    %13 = arith.extui %12 : i1 to i32
    %c0_i32_7 = arith.constant 0 : i32
    %14 = arith.cmpi ne, %13, %c0_i32_7 : i32
    scf.if %14 {
      %c0_8 = arith.constant 0 : index
      %c0_9 = arith.constant 0 : index
      %15 = vector.load %arg5[%c0_8, %c0_9] : memref<16x1xf32, #tpu.memory_space<vmem>>, vector<16x1xf32>
      %16 = arith.addf %15, %8 : vector<16x1xf32>
      %c0_10 = arith.constant 0 : index
      %c0_11 = arith.constant 0 : index
      %17 = vector.load %arg5[%c0_10, %c0_11] : memref<16x1xf32, #tpu.memory_space<vmem>>, vector<16x1xf32>
      tpu.vector_store %arg5[%c0_10, %c0_11], %16 {strides = array<i32>} : memref<16x1xf32, #tpu.memory_space<vmem>>, vector<16x1xf32>,
    } else {
    }
    return
  }
  func.func @transform_0(%arg0: i32, %arg1: i32) -> (i32, i32) {
    %c0_i32 = arith.constant 0 : i32
    %c0_i32_0 = arith.constant 0 : i32
    return %arg0, %c0_i32 : i32, i32
  }
  func.func @transform_1(%arg0: i32, %arg1: i32) -> (i32, i32) {
    %c0_i32 = arith.constant 0 : i32
    %c0_i32_0 = arith.constant 0 : i32
    return %c0_i32, %arg1 : i32, i32
  }
  func.func @transform_2(%arg0: i32, %arg1: i32) -> i32 {
    %c0_i32 = arith.constant 0 : i32
    %c0_i32_0 = arith.constant 0 : i32
    return %c0_i32 : i32
  }
  func.func @transform_3(%arg0: i32, %arg1: i32) -> (i32, i32) {
    %c0_i32 = arith.constant 0 : i32
    %c0_i32_0 = arith.constant 0 : i32
    return %arg0, %c0_i32 : i32, i32
  }
}

</mosaic_0001>

<llo_original>
// kernel: plnet_forward.1
$region0: #{plnet_forward.1}
  #allocation0 [shape = 'u32[]', space=smem, size = 0x4, offset = 0x4, fixed_abs, tag = 'smem constant byte address 0x4 - core index']
  #allocation1 [shape = 'u32[144,128]{1,0:T(1,128)}', space=vmem, size = 0x12000, scoped, tag = 'internal scratch']
  #allocation2 [shape = 'f32[1]{0:T(128)S(6)}', space=smem, size = 0x200, scoped, tag = 'scoped memory for plnet_forward.1']
  %s0 = inlined_call_operand.hbm [shape: f32[16,32], index: 0, kind: input, shape index: {}]
  %s1 = inlined_call_operand.hbm [shape: bf16[32,32], index: 1, kind: input, shape index: {}]
  %s2 = inlined_call_operand.<no memory space> [shape: f32[1], index: 2, kind: input, shape index: {}]
  %s3 = inlined_call_operand.hbm [shape: f32[16,1], index: 3, kind: output, shape index: {}]
  %s4 = sld [smem:[#allocation0]]
  $region38: #{plnet_forward.1} parent=0
    _
  %s6 = ssub.s32 1, %s4
  %s7 = scalar_select 0, %s6, %s4
  %8 = sst [smem:[#allocation2]] %s2
  $region1: #{plnet_forward.1} parent=0
    #allocation3 [shape = 'u8[8192]{0}', space=vmem, size = 0x2000, scoped, tag = 'input window, operand 0, single buffered']
    #allocation4 [shape = 's32[1]{0}', space=sflag, size = 0x4, scoped, tag = 'scoped memory for plnet_forward.1']
    #allocation5 [shape = 's32[1]{0}', space=sflag, size = 0x4, scoped, tag = 'scoped memory for plnet_forward.1']
    #allocation6 [shape = 'u8[8192]{0}', space=vmem, size = 0x2000, scoped, tag = 'input window, operand 1, single buffered']
    #allocation7 [shape = 's32[1]{0}', space=sflag, size = 0x4, scoped, tag = 'scoped memory for plnet_forward.1']
    #allocation8 [shape = 'u8[8192]{0}', space=vmem, size = 0x2000, scoped, tag = 'output window, operand 0, single buffered']
    %9 = vsyncpa [#allocation4], 0
    %10 = vsyncpa [#allocation7], 0
    %11 = vsyncpa [#allocation5], 0
    // Predicated region
    $region2: #{plnet_forward.1} parent=1 // pred_check
      _
    $region3: #{plnet_forward.1} parent=1 // pred_check_branch
      %13 = sbr.rel (0) target = $region5
    $region4: #{plnet_forward.1} parent=1 // pred_region
      %s15 = ssub.s32 256, 256
      %16 = vsyncadd [#allocation4], %s15
      %s17 = sshll.u32 [#allocation3], 4
      %s18 = int_to_ptr.vmem [resolvable:$true] %s17
      %23 = dma.hbm_to_vmem [thread:$0]  %s0, 256, %s18, [#allocation4], 128, 128, 8
    $region5: #{plnet_forward.1} parent=1 // pred_fallthru
      _
    // Predicated region
    $region6: #{plnet_forward.1} parent=1 // pred_check
      _
    $region7: #{plnet_forward.1} parent=1 // pred_check_branch
      %25 = sbr.rel (0) target = $region9
    $region8: #{plnet_forward.1} parent=1 // pred_region
      %s27 = ssub.s32 256, 256
      %28 = vsyncadd [#allocation7], %s27
      %s29 = sshll.u32 [#allocation6], 4
      %s30 = int_to_ptr.vmem [resolvable:$true] %s29
      %35 = dma.hbm_to_vmem [thread:$0]  %s1, 256, %s30, [#allocation7], 64, 64, 4
    $region9: #{plnet_forward.1} parent=1 // pred_fallthru
      _
    // Predicated region
    $region10: #{plnet_forward.1} parent=1 // pred_check
      _
    $region11: #{plnet_forward.1} parent=1 // pred_check_branch
      %37 = sbr.rel (0) target = $region13
    $region12: #{plnet_forward.1} parent=1 // pred_region
      _
    $region13: #{plnet_forward.1} parent=1 // pred_fallthru
      _
    // Predicated region
    $region14: #{plnet_forward.1} parent=1 // pred_check
      _
    $region15: #{plnet_forward.1} parent=1 // pred_check_branch
      %39 = sbr.rel (0) target = $region17
    $region16: #{plnet_forward.1} parent=1 // pred_region
      %40 = dma.done [#allocation4], 256
    $region17: #{plnet_forward.1} parent=1 // pred_fallthru
      _
    // Predicated region
    $region18: #{plnet_forward.1} parent=1 // pred_check
      _
    $region19: #{plnet_forward.1} parent=1 // pred_check_branch
      %42 = sbr.rel (0) target = $region21
    $region20: #{plnet_forward.1} parent=1 // pred_region
      %43 = dma.done [#allocation7], 256
    $region21: #{plnet_forward.1} parent=1 // pred_fallthru
      _
    %v45 = vld [vmem:[#allocation3] sm:$0xff]
    %v46 = vld [vmem:[#allocation3 + $0x8] sm:$0xff]
    %v47 = vpack.c.bf16 %v46, %v45
    %v48 = vld [vmem:[#allocation6] sm:$0xf]
    %v49 = vld [vmem:[#allocation6 + $0x4] sm:$0xf]
    %v50 = vld [vmem:[#allocation6 + $0x8] sm:$0xf]
    %v51 = vld [vmem:[#allocation6 + $0xc] sm:$0xf]
    %v56 = vunpack.c.l.b16 %v48
    %v57 = vunpack.c.l.b16 %v49
    %v58 = vunpack.c.l.b16 %v50
    %v59 = vunpack.c.l.b16 %v51
    %v60 = vpack.c.b16 %v57, %v56
    %v61 = vpack.c.b16 %v59, %v58
    %vm64 = vcmask 261120
    %v66 = vsel %vm64, %v47, 0
    %68 = vmatprep.subr.bf16.mxu0 0
    %69 = vmatpush1.bf16.msra.mxu0 %v60
    %70 = vmatprep.subr.bf16.mxu0 0
    %71 = vmatpush1.bf16.msra.mxu0 %v61
    %72 = vmatprep.subr.bf16.mxu0 0
    %73 = vmatpush1.bf16.msra.mxu0 0
    %74 = vmatprep.subr.bf16.mxu0 0
    %75 = vmatpush1.bf16.msra.mxu0 0
    %76 = vmatprep.subr.bf16.mxu0 0
    %77 = vmatpush1.bf16.msra.mxu0 0
    %78 = vmatprep.subr.bf16.mxu0 0
    %79 = vmatpush1.bf16.msra.mxu0 0
    %80 = vmatprep.subr.bf16.mxu0 0
    %81 = vmatpush1.bf16.msra.mxu0 0
    %82 = vmatprep.subr.bf16.mxu0 0
    %83 = vmatpush1.bf16.msra.mxu0 0
    %84 = vmatprep.subr.bf16.mxu0 0
    %85 = vmatpush1.bf16.msra.mxu0 0
    %86 = vmatprep.subr.bf16.mxu0 0
    %87 = vmatpush1.bf16.msra.mxu0 0
    %88 = vmatprep.subr.bf16.mxu0 0
    %89 = vmatpush1.bf16.msra.mxu0 0
    %90 = vmatprep.subr.bf16.mxu0 0
    %91 = vmatpush1.bf16.msra.mxu0 0
    %92 = vmatprep.subr.bf16.mxu0 0
    %93 = vmatpush1.bf16.msra.mxu0 0
    %94 = vmatprep.subr.bf16.mxu0 0
    %95 = vmatpush1.bf16.msra.mxu0 0
    %96 = vmatprep.subr.bf16.mxu0 0
    %97 = vmatpush1.bf16.msra.mxu0 0
    %98 = vmatprep.subr.bf16.mxu0 0
    %99 = vmatpush1.bf16.msra.mxu0 0
    %100 = vmatprep.mubr.bf16.mxu0 0
    %101 = vmatmul.mubr.bf16.gmra.mrb[0].mxu0 %v66
    %v102 = vpop.f32.mrb[0].mxu0
    %v103 = vadd.f32 0.0, %v102
    %v104 = vpop.f32.mrb[0].mxu0
    %v105 = vpop.f32.mrb[0].mxu0
    %v106 = vadd.f32 0.0, %v105
    %v107 = vpop.f32.mrb[0].mxu0
    %108 = vdwg.mxu0
    %v109 = vmul.f32 %v103, %v103
    %v110 = vmul.f32 %v106, %v106
    %v111 = vsel %vm64, %v109, 0.0
    %112 = vadd.xlane.f32.xlu0 %v111
    %v113 = vpop.xlane.xlu0 %112
    %v114 = vsel %vm64, %v110, 0.0
    %115 = vadd.xlane.f32.xlu0 %v114
    %v116 = vpop.xlane.xlu0 %115
    %v117 = vmul.f32 %v113, 0.5
    %v118 = vmul.f32 %v116, 0.5
    %p119 = scmp.eq.s32.totalorder 0, 0
    // Predicated region
    $region22: #{plnet_forward.1} parent=1 // pred_check
      %p120 = pneg %p119
    $region23: #{plnet_forward.1} parent=1 // pred_check_branch
      %122 = sbr.rel (%p120) target = $region25
    $region24: #{plnet_forward.1} parent=1 // pred_region
      %s123 = sld [smem:[#allocation2]]
      %v124 = vstv %s123
      %v125 = vadd.f32 %v117, %v124
      %v126 = vadd.f32 %v118, %v124
      %vm127 = vcmask 7168
      %128 = vst.msk [vmem:[#allocation8] sm:$0xff] %vm127, %v125
      %129 = vst.msk [vmem:[#allocation8 + $0x8] sm:$0xff] %vm127, %v126
    $region25: #{plnet_forward.1} parent=1 // pred_fallthru
      _
    %p130 = scmp.gt.s32.totalorder 0, 0
    // Predicated region
    $region26: #{plnet_forward.1} parent=1 // pred_check
      %p131 = pneg %p130
    $region27: #{plnet_forward.1} parent=1 // pred_check_branch
      %133 = sbr.rel (%p131) target = $region29
    $region28: #{plnet_forward.1} parent=1 // pred_region
      %v134 = vld [vmem:[#allocation8] sm:$0xff]
      %v135 = vld [vmem:[#allocation8 + $0x8] sm:$0xff]
      %v136 = vadd.f32 %v134, %v117
      %v137 = vadd.f32 %v135, %v118
      %vm138 = vcmask 7168
      %139 = vst.msk [vmem:[#allocation8] sm:$0xff] %vm138, %v136
      %140 = vst.msk [vmem:[#allocation8 + $0x8] sm:$0xff] %vm138, %v137
    $region29: #{plnet_forward.1} parent=1 // pred_fallthru
      _
    // Predicated region
    $region30: #{plnet_forward.1} parent=1 // pred_check
      _
    $region31: #{plnet_forward.1} parent=1 // pred_check_branch
      %142 = sbr.rel (0) target = $region33
    $region32: #{plnet_forward.1} parent=1 // pred_region
      %s144 = ssub.s32 256, 256
      %145 = vsyncadd [#allocation5], %s144
      %s146 = sshll.u32 [#allocation8], 4
      %s147 = int_to_ptr.vmem [resolvable:$true] %s146
      %152 = dma.vmem_to_hbm [thread:$0]  %s147, 256, %s3, [#allocation5], 128, 128, 8
    $region33: #{plnet_forward.1} parent=1 // pred_fallthru
      _
    // Predicated region
    $region34: #{plnet_forward.1} parent=1 // pred_check
      _
    $region35: #{plnet_forward.1} parent=1 // pred_check_branch
      %154 = sbr.rel (0) target = $region37
    $region36: #{plnet_forward.1} parent=1 // pred_region
      %155 = dma.done [#allocation5], 256
    $region37: #{plnet_forward.1} parent=1 // pred_fallthru
      _
    %156 = vsyncpa [#allocation4], 1
    %157 = vsyncpa [#allocation7], 1
    %158 = vsyncpa [#allocation5], 1

</llo_original>
